<compile_context>
chip_gen: v7x
topology: tpu7x:2x2x1
jax: 0.10.0
libtpu: 0.0.40
codegen_flags: <defaults>
</compile_context>

<pallas_src>
import jax
import jax.numpy as jnp
from jax.experimental import pallas as pl
from jax.experimental.pallas import tpu as pltpu

LANE = 128


# ----------------------------- Pallas kernels -------------------------------

def gcn_shared_kernel(a_ref, x_ref, w1_ref, b1_ref, w23_ref, o_ref, acc_ref):
    """hw = relu((A_hat @ X) @ W1 + b1) @ [W2|W3]   (per row tile).

    grid = (row tiles of A_hat, K reduction over source nodes); K is last.
    a_ref:   (TM, TK)     bf16  tile of A_hat
    x_ref:   (TK, Fp)     bf16  tile of node features
    w1_ref:  (Fp, Hp)     bf16  shared-layer weight (resident across K)
    b1_ref:  (1, Hp)      f32   shared-layer bias row
    w23_ref: (Hp, Gp)     bf16  concatenated mu|logvar weights (resident)
    o_ref:   (TM, Gp)     bf16  projected output tile (written on last K step)
    acc_ref: (TM, Fp)     f32   accumulator for A_hat @ X
    """
    k = pl.program_id(1)

    @pl.when(k == 0)
    def _():
        acc_ref[...] = jnp.zeros_like(acc_ref)

    # bf16 x bf16 -> f32 accumulate on the MXU
    acc_ref[...] += jnp.dot(a_ref[...], x_ref[...],
                            preferred_element_type=jnp.float32)

    @pl.when(k == pl.num_programs(1) - 1)
    def _():
        h = jnp.dot(acc_ref[...].astype(jnp.bfloat16), w1_ref[...],
                    preferred_element_type=jnp.float32) + b1_ref[...]
        h = jnp.maximum(h, 0.0)
        hw = jnp.dot(h.astype(jnp.bfloat16), w23_ref[...],
                     preferred_element_type=jnp.float32)
        o_ref[...] = hw.astype(o_ref.dtype)


def gcn_propagate_kernel(a_ref, zw_ref, b_ref, o_ref):
    """[mu|logvar] = A_hat @ HW + [b2|b3]   (accumulated in the f32 output).

    a_ref:  (TM, TK)  bf16  tile of A_hat
    zw_ref: (TK, Gp)  bf16  tile of the head-projected hidden states
    b_ref:  (1, Gp)   f32   concatenated mu|logvar bias row
    o_ref:  (TM, Gp)  f32   output tile, resident across the K axis
    """
    k = pl.program_id(1)

    @pl.when(k == 0)
    def _():
        o_ref[...] = jnp.zeros_like(o_ref)

    o_ref[...] += jnp.dot(a_ref[...], zw_ref[...],
                          preferred_element_type=jnp.float32)

    @pl.when(k == pl.num_programs(1) - 1)
    def _():
        o_ref[...] += b_ref[...]


def _shared_layer(a_p, x_p, w1_p, b1_p, w23_p, tm, tk):
    n_p = a_p.shape[0]
    f_p = x_p.shape[1]
    h_p = w1_p.shape[1]
    g_p = w23_p.shape[1]
    grid = (n_p // tm, n_p // tk)

    return pl.pallas_call(
        gcn_shared_kernel,
        out_shape=jax.ShapeDtypeStruct((n_p, g_p), jnp.bfloat16),
        grid_spec=pltpu.PrefetchScalarGridSpec(
            num_scalar_prefetch=0,
            grid=grid,
            in_specs=[
                pl.BlockSpec((tm, tk), lambda i, k: (i, k)),     # A_hat tile
                pl.BlockSpec((tk, f_p), lambda i, k: (k, 0)),    # X tile
                pl.BlockSpec((f_p, h_p), lambda i, k: (0, 0)),   # W1 (resident)
                pl.BlockSpec((1, h_p), lambda i, k: (0, 0)),     # b1 row
                pl.BlockSpec((h_p, g_p), lambda i, k: (0, 0)),   # W2|W3 (resident)
            ],
            out_specs=pl.BlockSpec((tm, g_p), lambda i, k: (i, 0)),
            scratch_shapes=[pltpu.VMEM((tm, f_p), jnp.float32)],
        ),
        compiler_params=pltpu.CompilerParams(
            dimension_semantics=("parallel", "arbitrary")),
    )(a_p, x_p, w1_p, b1_p, w23_p)


def _propagate_layer(a_p, zw_p, b_p, tm, tk):
    n_p = a_p.shape[0]
    g_p = zw_p.shape[1]
    grid = (n_p // tm, n_p // tk)

    return pl.pallas_call(
        gcn_propagate_kernel,
        out_shape=jax.ShapeDtypeStruct((n_p, g_p), jnp.float32),
        grid_spec=pltpu.PrefetchScalarGridSpec(
            num_scalar_prefetch=0,
            grid=grid,
            in_specs=[
                pl.BlockSpec((tm, tk), lambda i, k: (i, k)),     # A_hat tile
                pl.BlockSpec((tk, g_p), lambda i, k: (k, 0)),    # HW tile
                pl.BlockSpec((1, g_p), lambda i, k: (0, 0)),     # b2|b3 row
            ],
            out_specs=pl.BlockSpec((tm, g_p), lambda i, k: (i, 0)),
        ),
        compiler_params=pltpu.CompilerParams(
            dimension_semantics=("parallel", "arbitrary")),
    )(a_p, zw_p, b_p)


# ------------------------------ JAX wrapper ---------------------------------

def normalized_adjacency(edge_index, num_nodes):
    """Dense D^{-1/2}(A+I)D^{-1/2} matching torch_geometric gcn_norm."""
    src = edge_index[0]
    dst = edge_index[1]
    a = jnp.zeros((num_nodes, num_nodes), jnp.float32)
    a = a.at[dst, src].add(1.0)                       # row = target, col = source
    a = a + jnp.eye(num_nodes, dtype=jnp.float32)     # self loops
    deg = jnp.sum(a, axis=1)
    d_inv_sqrt = jnp.where(deg > 0.0, jax.lax.rsqrt(deg), 0.0)
    return d_inv_sqrt[:, None] * a * d_inv_sqrt[None, :]


def _round_up(x, m):
    return ((x + m - 1) // m) * m


def _pad2d(x, rows, cols):
    return jnp.pad(x, ((0, rows - x.shape[0]), (0, cols - x.shape[1])))


def gcn_encoder_forward(x, edge_index, params, *, tile=256):
    n, f_in = x.shape
    w1, b1, w2, b2, w3, b3 = params
    hidden = w1.shape[1]
    out_ch = w2.shape[1]

    # graph preprocessing glue (plain JAX): dense normalized adjacency
    a_hat = normalized_adjacency(edge_index, n)

    # ---- lane / tile padding (zero padding keeps results exact) ------------
    f_in_p = _round_up(f_in, LANE)
    hid_p = _round_up(hidden, LANE)
    out2 = 2 * out_ch
    out2_p = _round_up(out2, LANE)

    assert tile % LANE == 0
    tm = tk = min(tile, _round_up(n, LANE))
    n_p = _round_up(n, tm)

    a_p = _pad2d(a_hat, n_p, n_p).astype(jnp.bfloat16)      # cast once, biggest DMA
    x_p = _pad2d(x, n_p, f_in_p).astype(jnp.bfloat16)
    w1_p = _pad2d(w1, f_in_p, hid_p).astype(jnp.bfloat16)
    b1_p = _pad2d(b1.reshape(1, -1), 1, hid_p)               # f32

    # fuse mu/logvar heads: single weight / bias / output, split after
    w23_p = _pad2d(jnp.concatenate([w2, w3], axis=1),
                   hid_p, out2_p).astype(jnp.bfloat16)
    b23_p = _pad2d(jnp.concatenate([b2, b3], axis=0).reshape(1, -1), 1, out2_p)

    # ---- kernel 1: hw = relu((A_hat @ X) @ W1 + b1) @ [W2|W3]  (bf16) -------
    hw = _shared_layer(a_p, x_p, w1_p, b1_p, w23_p, tm, tk)

    # ---- kernel 2: [mu | logvar] = A_hat @ hw + [b2|b3]  (f32) --------------
    out = _propagate_layer(a_p, hw, b23_p, tm, tk)

    mu = out[:n, :out_ch]
    logvar = out[:n, out_ch:out2]
    return mu, logvar


# --------------------------- references --------------------------------------

def gcn_encoder_reference(x, edge_index, params):
    """Original f32 semantics (PyTorch module spec)."""
    a_hat = normalized_adjacency(edge_index, x.shape[0])
    w1, b1, w2, b2, w3, b3 = params
    h = jnp.maximum(a_hat @ (x @ w1) + b1, 0.0)
    mu = a_hat @ (h @ w2) + b2
    logvar = a_hat @ (h @ w3) + b3
    return mu, logvar


def gcn_encoder_reference_bf16(x, edge_index, params):
    """Same op ordering / bf16 operand casts as the kernels (tight check)."""
    bf = jnp.bfloat16
    a = normalized_adjacency(edge_index, x.shape[0]).astype(bf)
    w1, b1, w2, b2, w3, b3 = params
    ax = jnp.dot(a, x.astype(bf), preferred_element_type=jnp.float32)
    h = jnp.maximum(
        jnp.dot(ax.astype(bf), w1.astype(bf),
                preferred_element_type=jnp.float32) + b1, 0.0)
    w23 = jnp.concatenate([w2, w3], axis=1).astype(bf)
    b23 = jnp.concatenate([b2, b3], axis=0)
    hw = jnp.dot(h.astype(bf), w23, preferred_element_type=jnp.float32).astype(bf)
    out = jnp.dot(a, hw, preferred_element_type=jnp.float32) + b23
    o = w2.shape[1]
    return out[:, :o], out[:, o:2 * o]


# --------------------------------- main ---------------------------------------

if __name__ == "__main__":
    # small shapes consistent with a QM9-style molecular graph encoder
    N = 16            # nodes in the graph
    IN_CH = 8         # input node-feature channels
    HIDDEN = 32       # hidden_channels
    OUT_CH = 16       # out_channels (latent dim)

    key = jax.random.PRNGKey(0)
    kx, k1, kb1, k2, kb2, k3, kb3 = jax.random.split(key, 7)

    # node features
    x = jax.random.normal(kx, (N, IN_CH), dtype=jnp.float32)

    # undirected ring graph: edges i <-> (i+1) mod N, COO edge_index (2, E)
    idx = jnp.arange(N)
    src = jnp.concatenate([idx, (idx + 1) % N])
    dst = jnp.concatenate([(idx + 1) % N, idx])
    edge_index = jnp.stack([src, dst], axis=0)

    # deterministic glorot-ish parameter init (weights stored as (in, out))
    def glorot(k, fan_in, fan_out):
        lim = jnp.sqrt(6.0 / (fan_in + fan_out))
        return jax.random.uniform(k, (fan_in, fan_out), jnp.float32, -lim, lim)

    params = (
        glorot(k1, IN_CH, HIDDEN),
        jax.random.normal(kb1, (HIDDEN,), jnp.float32) * 0.01,
        glorot(k2, HIDDEN, OUT_CH),
        jax.random.normal(kb2, (OUT_CH,), jnp.float32) * 0.01,
        glorot(k3, HIDDEN, OUT_CH),
        jax.random.normal(kb3, (OUT_CH,), jnp.float32) * 0.01,
    )

    mu, logvar = jax.jit(gcn_encoder_forward)(x, edge_index, params)
    jax.block_until_ready((mu, logvar))
    assert mu.shape == (N, OUT_CH) and logvar.shape == (N, OUT_CH)

    # tight check against a reference with identical bf16-operand math
    mu_b, lv_b = gcn_encoder_reference_bf16(x, edge_index, params)
    assert jnp.allclose(mu, mu_b, atol=2e-3, rtol=2e-3)
    assert jnp.allclose(logvar, lv_b, atol=2e-3, rtol=2e-3)

    # looser check against the original full-f32 module semantics
    mu_f, lv_f = gcn_encoder_reference(x, edge_index, params)
    assert jnp.allclose(mu, mu_f, atol=5e-2, rtol=5e-2)
    assert jnp.allclose(logvar, lv_f, atol=5e-2, rtol=5e-2)

    print("KERNEL_OK")
</pallas_src>

<mosaic_0001>
module attributes {stable_mosaic.version = 11 : i64} {
  func.func private @main(%arg0: i32) attributes {dimension_semantics = [#tpu.dimension_semantics<core_parallel>], iteration_bounds = array<i64: 2>, tpu.core_type = #tpu.core_type<sc_scalar_subcore>, window_params = []} {
    return
  }
}

module attributes {stable_mosaic.version = 11 : i64} {
  func.func private @main(%arg0: i32) attributes {dimension_semantics = [#tpu.dimension_semantics<core_parallel>], iteration_bounds = array<i64: 2>, tpu.core_type = #tpu.core_type<sc_scalar_subcore>, window_params = []} {
    return
  }
}

module attributes {stable_mosaic.version = 11 : i64} {
  func.func @gcn_shared_kernel(%arg0: i32, %arg1: i32, %arg2: memref<128x128xbf16, #tpu.memory_space<vmem>>, %arg3: memref<128x128xbf16, #tpu.memory_space<vmem>>, %arg4: memref<128x128xbf16, #tpu.memory_space<vmem>>, %arg5: memref<1x128xf32, #tpu.memory_space<vmem>>, %arg6: memref<128x128xbf16, #tpu.memory_space<vmem>>, %arg7: memref<128x128xbf16, #tpu.memory_space<vmem>>, %arg8: memref<128x128xf32, #tpu.memory_space<vmem>>) attributes {dimension_semantics = [#tpu.dimension_semantics<parallel>, #tpu.dimension_semantics<arbitrary>], iteration_bounds = array<i64: 1, 1>, scalar_prefetch = 0 : i64, scratch_operands = 1 : i64, tpu.core_type = #tpu.core_type<tc>, window_params = [{transform_indices = @transform_0, window_bounds = array<i64: 128, 128>}, {transform_indices = @transform_1, window_bounds = array<i64: 128, 128>}, {pipeline_mode = #tpu.pipeline_mode<synchronous>, transform_indices = @transform_2, window_bounds = array<i64: 128, 128>}, {pipeline_mode = #tpu.pipeline_mode<synchronous>, transform_indices = @transform_3, window_bounds = array<i64: 1, 128>}, {pipeline_mode = #tpu.pipeline_mode<synchronous>, transform_indices = @transform_4, window_bounds = array<i64: 128, 128>}, {transform_indices = @transform_5, window_bounds = array<i64: 128, 128>}]} {
    %c0_i32 = arith.constant 0 : i32
    %0 = arith.cmpi eq, %arg1, %c0_i32 : i32
    %1 = arith.extui %0 : i1 to i32
    %c0_i32_0 = arith.constant 0 : i32
    %2 = arith.cmpi ne, %1, %c0_i32_0 : i32
    scf.if %2 {
      %cst_10 = arith.constant 0.000000e+00 : f32
      %12 = vector.broadcast %cst_10 : f32 to vector<128x128xf32>
      %c0_11 = arith.constant 0 : index
      %c0_12 = arith.constant 0 : index
      %13 = vector.load %arg8[%c0_11, %c0_12] : memref<128x128xf32, #tpu.memory_space<vmem>>, vector<128x128xf32>
      tpu.vector_store %arg8[%c0_11, %c0_12], %12 {strides = array<i32>} : memref<128x128xf32, #tpu.memory_space<vmem>>, vector<128x128xf32>,
    } else {
    }
    %c0 = arith.constant 0 : index
    %c0_1 = arith.constant 0 : index
    %3 = vector.load %arg8[%c0, %c0_1] : memref<128x128xf32, #tpu.memory_space<vmem>>, vector<128x128xf32>
    %c0_2 = arith.constant 0 : index
    %c0_3 = arith.constant 0 : index
    %4 = vector.load %arg2[%c0_2, %c0_3] : memref<128x128xbf16, #tpu.memory_space<vmem>>, vector<128x128xbf16>
    %c0_4 = arith.constant 0 : index
    %c0_5 = arith.constant 0 : index
    %5 = vector.load %arg3[%c0_4, %c0_5] : memref<128x128xbf16, #tpu.memory_space<vmem>>, vector<128x128xbf16>
    %cst = arith.constant dense<0.000000e+00> : vector<128x128xf32>
    %6 = tpu.matmul %4, %5, %cst {dimension_numbers = #tpu.dot_dimension_numbers<[1], [0], [0], [1], [0, 0, 1, 1], [], []>} : vector<128x128xbf16>, vector<128x128xbf16>, vector<128x128xf32> -> vector<128x128xf32>
    %7 = arith.addf %3, %6 : vector<128x128xf32>
    %c0_6 = arith.constant 0 : index
    %c0_7 = arith.constant 0 : index
    %8 = vector.load %arg8[%c0_6, %c0_7] : memref<128x128xf32, #tpu.memory_space<vmem>>, vector<128x128xf32>
    tpu.vector_store %arg8[%c0_6, %c0_7], %7 {strides = array<i32>} : memref<128x128xf32, #tpu.memory_space<vmem>>, vector<128x128xf32>,
    %c0_i32_8 = arith.constant 0 : i32
    %9 = arith.cmpi eq, %arg1, %c0_i32_8 : i32
    %10 = arith.extui %9 : i1 to i32
    %c0_i32_9 = arith.constant 0 : i32
    %11 = arith.cmpi ne, %10, %c0_i32_9 : i32
    scf.if %11 {
      %c0_10 = arith.constant 0 : index
      %c0_11 = arith.constant 0 : index
      %12 = vector.load %arg8[%c0_10, %c0_11] : memref<128x128xf32, #tpu.memory_space<vmem>>, vector<128x128xf32>
      %13 = arith.truncf %12 : vector<128x128xf32> to vector<128x128xbf16>
      %c0_12 = arith.constant 0 : index
      %c0_13 = arith.constant 0 : index
      %14 = vector.load %arg4[%c0_12, %c0_13] : memref<128x128xbf16, #tpu.memory_space<vmem>>, vector<128x128xbf16>
      %cst_14 = arith.constant dense<0.000000e+00> : vector<128x128xf32>
      %15 = tpu.matmul %13, %14, %cst_14 {dimension_numbers = #tpu.dot_dimension_numbers<[1], [0], [0], [1], [0, 0, 1, 1], [], []>} : vector<128x128xbf16>, vector<128x128xbf16>, vector<128x128xf32> -> vector<128x128xf32>
      %c0_15 = arith.constant 0 : index
      %c0_16 = arith.constant 0 : index
      %16 = vector.load %arg5[%c0_15, %c0_16] : memref<1x128xf32, #tpu.memory_space<vmem>>, vector<1x128xf32>
      %17 = vector.broadcast %16 : vector<1x128xf32> to vector<128x128xf32>
      %18 = arith.addf %15, %17 : vector<128x128xf32>
      %cst_17 = arith.constant 0.000000e+00 : f32
      %19 = vector.broadcast %cst_17 : f32 to vector<128x128xf32>
      %20 = arith.maximumf %18, %19 : vector<128x128xf32>
      %21 = arith.truncf %20 : vector<128x128xf32> to vector<128x128xbf16>
      %c0_18 = arith.constant 0 : index
      %c0_19 = arith.constant 0 : index
      %22 = vector.load %arg6[%c0_18, %c0_19] : memref<128x128xbf16, #tpu.memory_space<vmem>>, vector<128x128xbf16>
      %cst_20 = arith.constant dense<0.000000e+00> : vector<128x128xf32>
      %23 = tpu.matmul %21, %22, %cst_20 {dimension_numbers = #tpu.dot_dimension_numbers<[1], [0], [0], [1], [0, 0, 1, 1], [], []>} : vector<128x128xbf16>, vector<128x128xbf16>, vector<128x128xf32> -> vector<128x128xf32>
      %24 = arith.truncf %23 : vector<128x128xf32> to vector<128x128xbf16>
      %c0_21 = arith.constant 0 : index
      %c0_22 = arith.constant 0 : index
      %25 = vector.load %arg7[%c0_21, %c0_22] : memref<128x128xbf16, #tpu.memory_space<vmem>>, vector<128x128xbf16>
      tpu.vector_store %arg7[%c0_21, %c0_22], %24 {strides = array<i32>} : memref<128x128xbf16, #tpu.memory_space<vmem>>, vector<128x128xbf16>,
    } else {
    }
    return
  }
  func.func @transform_0(%arg0: i32, %arg1: i32) -> (i32, i32) {
    %c0_i32 = arith.constant 0 : i32
    return %arg0, %arg1 : i32, i32
  }
  func.func @transform_1(%arg0: i32, %arg1: i32) -> (i32, i32) {
    %c0_i32 = arith.constant 0 : i32
    %c0_i32_0 = arith.constant 0 : i32
    return %arg1, %c0_i32 : i32, i32
  }
  func.func @transform_2(%arg0: i32, %arg1: i32) -> (i32, i32) {
    %c0_i32 = arith.constant 0 : i32
    %c0_i32_0 = arith.constant 0 : i32
    %c0_i32_1 = arith.constant 0 : i32
    return %c0_i32, %c0_i32_0 : i32, i32
  }
  func.func @transform_3(%arg0: i32, %arg1: i32) -> (i32, i32) {
    %c0_i32 = arith.constant 0 : i32
    %c0_i32_0 = arith.constant 0 : i32
    %c0_i32_1 = arith.constant 0 : i32
    return %c0_i32, %c0_i32_0 : i32, i32
  }
  func.func @transform_4(%arg0: i32, %arg1: i32) -> (i32, i32) {
    %c0_i32 = arith.constant 0 : i32
    %c0_i32_0 = arith.constant 0 : i32
    %c0_i32_1 = arith.constant 0 : i32
    return %c0_i32, %c0_i32_0 : i32, i32
  }
  func.func @transform_5(%arg0: i32, %arg1: i32) -> (i32, i32) {
    %c0_i32 = arith.constant 0 : i32
    %c0_i32_0 = arith.constant 0 : i32
    return %arg0, %c0_i32 : i32, i32
  }
}

module attributes {stable_mosaic.version = 11 : i64} {
  func.func @gcn_propagate_kernel(%arg0: i32, %arg1: i32, %arg2: memref<128x128xbf16, #tpu.memory_space<vmem>>, %arg3: memref<128x128xbf16, #tpu.memory_space<vmem>>, %arg4: memref<1x128xf32, #tpu.memory_space<vmem>>, %arg5: memref<128x128xf32, #tpu.memory_space<vmem>>) attributes {dimension_semantics = [#tpu.dimension_semantics<parallel>, #tpu.dimension_semantics<arbitrary>], iteration_bounds = array<i64: 1, 1>, scalar_prefetch = 0 : i64, scratch_operands = 0 : i64, tpu.core_type = #tpu.core_type<tc>, window_params = [{transform_indices = @transform_0, window_bounds = array<i64: 128, 128>}, {transform_indices = @transform_1, window_bounds = array<i64: 128, 128>}, {pipeline_mode = #tpu.pipeline_mode<synchronous>, transform_indices = @transform_2, window_bounds = array<i64: 1, 128>}, {transform_indices = @transform_3, window_bounds = array<i64: 128, 128>}]} {
    %c0_i32 = arith.constant 0 : i32
    %0 = arith.cmpi eq, %arg1, %c0_i32 : i32
    %1 = arith.extui %0 : i1 to i32
    %c0_i32_0 = arith.constant 0 : i32
    %2 = arith.cmpi ne, %1, %c0_i32_0 : i32
    scf.if %2 {
      %cst_10 = arith.constant 0.000000e+00 : f32
      %12 = vector.broadcast %cst_10 : f32 to vector<128x128xf32>
      %c0_11 = arith.constant 0 : index
      %c0_12 = arith.constant 0 : index
      %13 = vector.load %arg5[%c0_11, %c0_12] : memref<128x128xf32, #tpu.memory_space<vmem>>, vector<128x128xf32>
      tpu.vector_store %arg5[%c0_11, %c0_12], %12 {strides = array<i32>} : memref<128x128xf32, #tpu.memory_space<vmem>>, vector<128x128xf32>,
    } else {
    }
    %c0 = arith.constant 0 : index
    %c0_1 = arith.constant 0 : index
    %3 = vector.load %arg5[%c0, %c0_1] : memref<128x128xf32, #tpu.memory_space<vmem>>, vector<128x128xf32>
    %c0_2 = arith.constant 0 : index
    %c0_3 = arith.constant 0 : index
    %4 = vector.load %arg2[%c0_2, %c0_3] : memref<128x128xbf16, #tpu.memory_space<vmem>>, vector<128x128xbf16>
    %c0_4 = arith.constant 0 : index
    %c0_5 = arith.constant 0 : index
    %5 = vector.load %arg3[%c0_4, %c0_5] : memref<128x128xbf16, #tpu.memory_space<vmem>>, vector<128x128xbf16>
    %cst = arith.constant dense<0.000000e+00> : vector<128x128xf32>
    %6 = tpu.matmul %4, %5, %cst {dimension_numbers = #tpu.dot_dimension_numbers<[1], [0], [0], [1], [0, 0, 1, 1], [], []>} : vector<128x128xbf16>, vector<128x128xbf16>, vector<128x128xf32> -> vector<128x128xf32>
    %7 = arith.addf %3, %6 : vector<128x128xf32>
    %c0_6 = arith.constant 0 : index
    %c0_7 = arith.constant 0 : index
    %8 = vector.load %arg5[%c0_6, %c0_7] : memref<128x128xf32, #tpu.memory_space<vmem>>, vector<128x128xf32>
    tpu.vector_store %arg5[%c0_6, %c0_7], %7 {strides = array<i32>} : memref<128x128xf32, #tpu.memory_space<vmem>>, vector<128x128xf32>,
    %c0_i32_8 = arith.constant 0 : i32
    %9 = arith.cmpi eq, %arg1, %c0_i32_8 : i32
    %10 = arith.extui %9 : i1 to i32
    %c0_i32_9 = arith.constant 0 : i32
    %11 = arith.cmpi ne, %10, %c0_i32_9 : i32
    scf.if %11 {
      %c0_10 = arith.constant 0 : index
      %c0_11 = arith.constant 0 : index
      %12 = vector.load %arg5[%c0_10, %c0_11] : memref<128x128xf32, #tpu.memory_space<vmem>>, vector<128x128xf32>
      %c0_12 = arith.constant 0 : index
      %c0_13 = arith.constant 0 : index
      %13 = vector.load %arg4[%c0_12, %c0_13] : memref<1x128xf32, #tpu.memory_space<vmem>>, vector<1x128xf32>
      %14 = vector.broadcast %13 : vector<1x128xf32> to vector<128x128xf32>
      %15 = arith.addf %12, %14 : vector<128x128xf32>
      %c0_14 = arith.constant 0 : index
      %c0_15 = arith.constant 0 : index
      %16 = vector.load %arg5[%c0_14, %c0_15] : memref<128x128xf32, #tpu.memory_space<vmem>>, vector<128x128xf32>
      tpu.vector_store %arg5[%c0_14, %c0_15], %15 {strides = array<i32>} : memref<128x128xf32, #tpu.memory_space<vmem>>, vector<128x128xf32>,
    } else {
    }
    return
  }
  func.func @transform_0(%arg0: i32, %arg1: i32) -> (i32, i32) {
    %c0_i32 = arith.constant 0 : i32
    return %arg0, %arg1 : i32, i32
  }
  func.func @transform_1(%arg0: i32, %arg1: i32) -> (i32, i32) {
    %c0_i32 = arith.constant 0 : i32
    %c0_i32_0 = arith.constant 0 : i32
    return %arg1, %c0_i32 : i32, i32
  }
  func.func @transform_2(%arg0: i32, %arg1: i32) -> (i32, i32) {
    %c0_i32 = arith.constant 0 : i32
    %c0_i32_0 = arith.constant 0 : i32
    %c0_i32_1 = arith.constant 0 : i32
    return %c0_i32, %c0_i32_0 : i32, i32
  }
  func.func @transform_3(%arg0: i32, %arg1: i32) -> (i32, i32) {
    %c0_i32 = arith.constant 0 : i32
    %c0_i32_0 = arith.constant 0 : i32
    return %arg0, %c0_i32 : i32, i32
  }
}

</mosaic_0001>

<llo_original>
// kernel: gcn_encoder_forward.3
$region0: #{gcn_encoder_forward.3}
  #allocation0 [shape = 'u32[]', space=smem, size = 0x4, offset = 0x4, fixed_abs, tag = 'smem constant byte address 0x4 - core index']
  #allocation1 [shape = 'u32[144,128]{1,0:T(1,128)}', space=vmem, size = 0x12000, scoped, tag = 'internal scratch']
  %s0 = inlined_call_operand.vmem [shape: bf16[128,128], index: 0, kind: input, shape index: {}]
  %s1 = inlined_call_operand.vmem [shape: bf16[128,128], index: 1, kind: input, shape index: {}]
  %s2 = inlined_call_operand.vmem [shape: f32[1,128], index: 2, kind: input, shape index: {}]
  %s3 = inlined_call_operand.vmem [shape: f32[128,128], index: 3, kind: output, shape index: {}]
  %s4 = sld [smem:[#allocation0]]
  $region30: #{gcn_encoder_forward.3} parent=0
    _
  %s6 = ssub.s32 1, %s4
  %s7 = scalar_select 0, %s6, %s4
  // Predicated region
  $region2: #{gcn_encoder_forward.3} parent=0 // pred_check
    _
  $region3: #{gcn_encoder_forward.3} parent=0 // pred_check_branch
    %9 = sbr.rel (0) target = $region5
  $region4: #{gcn_encoder_forward.3} parent=0 // pred_region
    _
  $region5: #{gcn_encoder_forward.3} parent=0 // pred_fallthru
    _
  // Predicated region
  $region6: #{gcn_encoder_forward.3} parent=0 // pred_check
    _
  $region7: #{gcn_encoder_forward.3} parent=0 // pred_check_branch
    %11 = sbr.rel (0) target = $region9
  $region8: #{gcn_encoder_forward.3} parent=0 // pred_region
    _
  $region9: #{gcn_encoder_forward.3} parent=0 // pred_fallthru
    _
  // Predicated region
  $region10: #{gcn_encoder_forward.3} parent=0 // pred_check
    _
  $region11: #{gcn_encoder_forward.3} parent=0 // pred_check_branch
    %13 = sbr.rel (0) target = $region13
  $region12: #{gcn_encoder_forward.3} parent=0 // pred_region
    _
  $region13: #{gcn_encoder_forward.3} parent=0 // pred_fallthru
    _
  %p15 = scmp.eq.s32.totalorder 0, 0
  // Predicated region
  $region14: #{gcn_encoder_forward.3} parent=0 // pred_check
    %p16 = pneg %p15
  $region15: #{gcn_encoder_forward.3} parent=0 // pred_check_branch
    %18 = sbr.rel (%p16) target = $region17
  $region16: #{gcn_encoder_forward.3} parent=0 // pred_region
    %19 = vst [vmem:[%s3] sm:$0xff] 0.0
    %20 = vst [vmem:[%s3 + $0x8] sm:$0xff] 0.0
    %21 = vst [vmem:[%s3 + $0x10] sm:$0xff] 0.0
    %22 = vst [vmem:[%s3 + $0x18] sm:$0xff] 0.0
    %23 = vst [vmem:[%s3 + $0x20] sm:$0xff] 0.0
    %24 = vst [vmem:[%s3 + $0x28] sm:$0xff] 0.0
    %25 = vst [vmem:[%s3 + $0x30] sm:$0xff] 0.0
    %26 = vst [vmem:[%s3 + $0x38] sm:$0xff] 0.0
    %27 = vst [vmem:[%s3 + $0x40] sm:$0xff] 0.0
    %28 = vst [vmem:[%s3 + $0x48] sm:$0xff] 0.0
    %29 = vst [vmem:[%s3 + $0x50] sm:$0xff] 0.0
    %30 = vst [vmem:[%s3 + $0x58] sm:$0xff] 0.0
    %31 = vst [vmem:[%s3 + $0x60] sm:$0xff] 0.0
    %32 = vst [vmem:[%s3 + $0x68] sm:$0xff] 0.0
    %33 = vst [vmem:[%s3 + $0x70] sm:$0xff] 0.0
    %34 = vst [vmem:[%s3 + $0x78] sm:$0xff] 0.0
  $region17: #{gcn_encoder_forward.3} parent=0 // pred_fallthru
    _
  %v35 = vld [vmem:[%s3] sm:$0xff]
  %v36 = vld [vmem:[%s3 + $0x8] sm:$0xff]
  %v37 = vld [vmem:[%s3 + $0x10] sm:$0xff]
  %v38 = vld [vmem:[%s3 + $0x18] sm:$0xff]
  %v39 = vld [vmem:[%s3 + $0x20] sm:$0xff]
  %v40 = vld [vmem:[%s3 + $0x28] sm:$0xff]
  %v41 = vld [vmem:[%s3 + $0x30] sm:$0xff]
  %v42 = vld [vmem:[%s3 + $0x38] sm:$0xff]
  %v43 = vld [vmem:[%s3 + $0x40] sm:$0xff]
  %v44 = vld [vmem:[%s3 + $0x48] sm:$0xff]
  %v45 = vld [vmem:[%s3 + $0x50] sm:$0xff]
  %v46 = vld [vmem:[%s3 + $0x58] sm:$0xff]
  %v47 = vld [vmem:[%s3 + $0x60] sm:$0xff]
  %v48 = vld [vmem:[%s3 + $0x68] sm:$0xff]
  %v49 = vld [vmem:[%s3 + $0x70] sm:$0xff]
  %v50 = vld [vmem:[%s3 + $0x78] sm:$0xff]
  %v51 = vld [vmem:[%s0] sm:$0xf]
  %v52 = vld [vmem:[%s0 + $0x4] sm:$0xf]
  %v53 = vld [vmem:[%s0 + $0x8] sm:$0xf]
  %v54 = vld [vmem:[%s0 + $0xc] sm:$0xf]
  %v55 = vld [vmem:[%s0 + $0x10] sm:$0xf]
  %v56 = vld [vmem:[%s0 + $0x14] sm:$0xf]
  %v57 = vld [vmem:[%s0 + $0x18] sm:$0xf]
  %v58 = vld [vmem:[%s0 + $0x1c] sm:$0xf]
  %v59 = vld [vmem:[%s0 + $0x20] sm:$0xf]
  %v60 = vld [vmem:[%s0 + $0x24] sm:$0xf]
  %v61 = vld [vmem:[%s0 + $0x28] sm:$0xf]
  %v62 = vld [vmem:[%s0 + $0x2c] sm:$0xf]
  %v63 = vld [vmem:[%s0 + $0x30] sm:$0xf]
  %v64 = vld [vmem:[%s0 + $0x34] sm:$0xf]
  %v65 = vld [vmem:[%s0 + $0x38] sm:$0xf]
  %v66 = vld [vmem:[%s0 + $0x3c] sm:$0xf]
  %v67 = vld [vmem:[%s1] sm:$0xf]
  %v68 = vld [vmem:[%s1 + $0x4] sm:$0xf]
  %v69 = vld [vmem:[%s1 + $0x8] sm:$0xf]
  %v70 = vld [vmem:[%s1 + $0xc] sm:$0xf]
  %v71 = vld [vmem:[%s1 + $0x10] sm:$0xf]
  %v72 = vld [vmem:[%s1 + $0x14] sm:$0xf]
  %v73 = vld [vmem:[%s1 + $0x18] sm:$0xf]
  %v74 = vld [vmem:[%s1 + $0x1c] sm:$0xf]
  %v75 = vld [vmem:[%s1 + $0x20] sm:$0xf]
  %v76 = vld [vmem:[%s1 + $0x24] sm:$0xf]
  %v77 = vld [vmem:[%s1 + $0x28] sm:$0xf]
  %v78 = vld [vmem:[%s1 + $0x2c] sm:$0xf]
  %v79 = vld [vmem:[%s1 + $0x30] sm:$0xf]
  %v80 = vld [vmem:[%s1 + $0x34] sm:$0xf]
  %v81 = vld [vmem:[%s1 + $0x38] sm:$0xf]
  %v82 = vld [vmem:[%s1 + $0x3c] sm:$0xf]
  %v99 = vunpack.c.l.b16 %v51
  %v100 = vunpack.c.l.b16 %v52
  %v101 = vunpack.c.l.b16 %v53
  %v102 = vunpack.c.l.b16 %v54
  %v103 = vunpack.c.l.b16 %v55
  %v104 = vunpack.c.l.b16 %v56
  %v105 = vunpack.c.l.b16 %v57
  %v106 = vunpack.c.l.b16 %v58
  %v107 = vunpack.c.l.b16 %v59
  %v108 = vunpack.c.l.b16 %v60
  %v109 = vunpack.c.l.b16 %v61
  %v110 = vunpack.c.l.b16 %v62
  %v111 = vunpack.c.l.b16 %v63
  %v112 = vunpack.c.l.b16 %v64
  %v113 = vunpack.c.l.b16 %v65
  %v114 = vunpack.c.l.b16 %v66
  %v115 = vpack.c.b16 %v100, %v99
  %v116 = vpack.c.b16 %v102, %v101
  %v117 = vpack.c.b16 %v104, %v103
  %v118 = vpack.c.b16 %v106, %v105
  %v119 = vpack.c.b16 %v108, %v107
  %v120 = vpack.c.b16 %v110, %v109
  %v121 = vpack.c.b16 %v112, %v111
  %v122 = vpack.c.b16 %v114, %v113
  %v147 = vunpack.c.l.b16 %v67
  %v148 = vunpack.c.l.b16 %v68
  %v149 = vunpack.c.l.b16 %v69
  %v150 = vunpack.c.l.b16 %v70
  %v151 = vunpack.c.l.b16 %v71
  %v152 = vunpack.c.l.b16 %v72
  %v153 = vunpack.c.l.b16 %v73
  %v154 = vunpack.c.l.b16 %v74
  %v155 = vunpack.c.l.b16 %v75
  %v156 = vunpack.c.l.b16 %v76
  %v157 = vunpack.c.l.b16 %v77
  %v158 = vunpack.c.l.b16 %v78
  %v159 = vunpack.c.l.b16 %v79
  %v160 = vunpack.c.l.b16 %v80
  %v161 = vunpack.c.l.b16 %v81
  %v162 = vunpack.c.l.b16 %v82
  %v163 = vpack.c.b16 %v148, %v147
  %v164 = vpack.c.b16 %v150, %v149
  %v165 = vpack.c.b16 %v152, %v151
  %v166 = vpack.c.b16 %v154, %v153
  %v167 = vpack.c.b16 %v156, %v155
  %v168 = vpack.c.b16 %v158, %v157
  %v169 = vpack.c.b16 %v160, %v159
  %v170 = vpack.c.b16 %v162, %v161
  %179 = vmatprep.subr.bf16.mxu0 0
  %180 = vmatpush1.bf16.msra.mxu0 %v163
  %181 = vmatprep.subr.bf16.mxu0 0
  %182 = vmatpush1.bf16.msra.mxu0 %v164
  %183 = vmatprep.subr.bf16.mxu0 0
  %184 = vmatpush1.bf16.msra.mxu0 %v165
  %185 = vmatprep.subr.bf16.mxu0 0
  %186 = vmatpush1.bf16.msra.mxu0 %v166
  %187 = vmatprep.subr.bf16.mxu0 0
  %188 = vmatpush1.bf16.msra.mxu0 %v167
  %189 = vmatprep.subr.bf16.mxu0 0
  %190 = vmatpush1.bf16.msra.mxu0 %v168
  %191 = vmatprep.subr.bf16.mxu0 0
  %192 = vmatpush1.bf16.msra.mxu0 %v169
  %193 = vmatprep.subr.bf16.mxu0 0
  %194 = vmatpush1.bf16.msra.mxu0 %v170
  %195 = vmatprep.subr.bf16.mxu0 0
  %196 = vmatpush1.bf16.msra.mxu0 0
  %197 = vmatprep.subr.bf16.mxu0 0
  %198 = vmatpush1.bf16.msra.mxu0 0
  %199 = vmatprep.subr.bf16.mxu0 0
  %200 = vmatpush1.bf16.msra.mxu0 0
  %201 = vmatprep.subr.bf16.mxu0 0
  %202 = vmatpush1.bf16.msra.mxu0 0
  %203 = vmatprep.subr.bf16.mxu0 0
  %204 = vmatpush1.bf16.msra.mxu0 0
  %205 = vmatprep.subr.bf16.mxu0 0
  %206 = vmatpush1.bf16.msra.mxu0 0
  %207 = vmatprep.subr.bf16.mxu0 0
  %208 = vmatpush1.bf16.msra.mxu0 0
  %209 = vmatprep.subr.bf16.mxu0 0
  %210 = vmatpush1.bf16.msra.mxu0 0
  %211 = vmatprep.mubr.bf16.mxu0 0
  %212 = vmatmul.mubr.bf16.gmra.mrb[0].mxu0 %v115
  %v213 = vpop.f32.mrb[0].mxu0
  %v214 = vadd.f32 0.0, %v213
  %v215 = vpop.f32.mrb[0].mxu0
  %v216 = vpop.f32.mrb[0].mxu0
  %v217 = vadd.f32 0.0, %v216
  %v218 = vpop.f32.mrb[0].mxu0
  %219 = vmatprep.mubr.bf16.mxu0 0
  %220 = vmatmul.mubr.bf16.gmra.mrb[0].mxu0 %v116
  %v221 = vpop.f32.mrb[0].mxu0
  %v222 = vadd.f32 0.0, %v221
  %v223 = vpop.f32.mrb[0].mxu0
  %v224 = vpop.f32.mrb[0].mxu0
  %v225 = vadd.f32 0.0, %v224
  %v226 = vpop.f32.mrb[0].mxu0
  %227 = vmatprep.mubr.bf16.mxu0 0
  %228 = vmatmul.mubr.bf16.gmra.mrb[0].mxu0 %v117
  %v229 = vpop.f32.mrb[0].mxu0
  %v230 = vadd.f32 0.0, %v229
  %v231 = vpop.f32.mrb[0].mxu0
  %v232 = vpop.f32.mrb[0].mxu0
  %v233 = vadd.f32 0.0, %v232
  %v234 = vpop.f32.mrb[0].mxu0
  %235 = vmatprep.mubr.bf16.mxu0 0
  %236 = vmatmul.mubr.bf16.gmra.mrb[0].mxu0 %v118
  %v237 = vpop.f32.mrb[0].mxu0
  %v238 = vadd.f32 0.0, %v237
  %v239 = vpop.f32.mrb[0].mxu0
  %v240 = vpop.f32.mrb[0].mxu0
  %v241 = vadd.f32 0.0, %v240
  %v242 = vpop.f32.mrb[0].mxu0
  %243 = vmatprep.mubr.bf16.mxu0 0
  %244 = vmatmul.mubr.bf16.gmra.mrb[0].mxu0 %v119
  %v245 = vpop.f32.mrb[0].mxu0
  %v246 = vadd.f32 0.0, %v245
  %v247 = vpop.f32.mrb[0].mxu0
  %v248 = vpop.f32.mrb[0].mxu0
  %v249 = vadd.f32 0.0, %v248
  %v250 = vpop.f32.mrb[0].mxu0
  %251 = vmatprep.mubr.bf16.mxu0 0
  %252 = vmatmul.mubr.bf16.gmra.mrb[0].mxu0 %v120
  %v253 = vpop.f32.mrb[0].mxu0
  %v254 = vadd.f32 0.0, %v253
  %v255 = vpop.f32.mrb[0].mxu0
  %v256 = vpop.f32.mrb[0].mxu0
  %v257 = vadd.f32 0.0, %v256
  %v258 = vpop.f32.mrb[0].mxu0
  %259 = vmatprep.mubr.bf16.mxu0 0
  %260 = vmatmul.mubr.bf16.gmra.mrb[0].mxu0 %v121
  %v261 = vpop.f32.mrb[0].mxu0
  %v262 = vadd.f32 0.0, %v261
  %v263 = vpop.f32.mrb[0].mxu0
  %v264 = vpop.f32.mrb[0].mxu0
  %v265 = vadd.f32 0.0, %v264
  %v266 = vpop.f32.mrb[0].mxu0
  %267 = vmatprep.mubr.bf16.mxu0 0
  %268 = vmatmul.mubr.bf16.gmra.mrb[0].mxu0 %v122
  %v269 = vpop.f32.mrb[0].mxu0
  %v270 = vadd.f32 0.0, %v269
  %v271 = vpop.f32.mrb[0].mxu0
  %v272 = vpop.f32.mrb[0].mxu0
  %v273 = vadd.f32 0.0, %v272
  %v274 = vpop.f32.mrb[0].mxu0
  %275 = vdwg.mxu0
  %v276 = vadd.f32 %v35, %v214
  %v277 = vadd.f32 %v36, %v217
  %v278 = vadd.f32 %v37, %v222
  %v279 = vadd.f32 %v38, %v225
  %v280 = vadd.f32 %v39, %v230
  %v281 = vadd.f32 %v40, %v233
  %v282 = vadd.f32 %v41, %v238
  %v283 = vadd.f32 %v42, %v241
  %v284 = vadd.f32 %v43, %v246
  %v285 = vadd.f32 %v44, %v249
  %v286 = vadd.f32 %v45, %v254
  %v287 = vadd.f32 %v46, %v257
  %v288 = vadd.f32 %v47, %v262
  %v289 = vadd.f32 %v48, %v265
  %v290 = vadd.f32 %v49, %v270
  %v291 = vadd.f32 %v50, %v273
  %292 = vst [vmem:[%s3] sm:$0xff] %v276
  %293 = vst [vmem:[%s3 + $0x8] sm:$0xff] %v277
  %294 = vst [vmem:[%s3 + $0x10] sm:$0xff] %v278
  %295 = vst [vmem:[%s3 + $0x18] sm:$0xff] %v279
  %296 = vst [vmem:[%s3 + $0x20] sm:$0xff] %v280
  %297 = vst [vmem:[%s3 + $0x28] sm:$0xff] %v281
  %298 = vst [vmem:[%s3 + $0x30] sm:$0xff] %v282
  %299 = vst [vmem:[%s3 + $0x38] sm:$0xff] %v283
  %300 = vst [vmem:[%s3 + $0x40] sm:$0xff] %v284
  %301 = vst [vmem:[%s3 + $0x48] sm:$0xff] %v285
  %302 = vst [vmem:[%s3 + $0x50] sm:$0xff] %v286
  %303 = vst [vmem:[%s3 + $0x58] sm:$0xff] %v287
  %304 = vst [vmem:[%s3 + $0x60] sm:$0xff] %v288
  %305 = vst [vmem:[%s3 + $0x68] sm:$0xff] %v289
  %306 = vst [vmem:[%s3 + $0x70] sm:$0xff] %v290
  %307 = vst [vmem:[%s3 + $0x78] sm:$0xff] %v291
  // Predicated region
  $region18: #{gcn_encoder_forward.3} parent=0 // pred_check
    %p308 = pneg %p15
  $region19: #{gcn_encoder_forward.3} parent=0 // pred_check_branch
    %310 = sbr.rel (%p308) target = $region21
  $region20: #{gcn_encoder_forward.3} parent=0 // pred_region
    %v311 = vld [vmem:[%s3] sm:$0xff]
    %v312 = vld [vmem:[%s3 + $0x8] sm:$0xff]
    %v313 = vld [vmem:[%s3 + $0x10] sm:$0xff]
    %v314 = vld [vmem:[%s3 + $0x18] sm:$0xff]
    %v315 = vld [vmem:[%s3 + $0x20] sm:$0xff]
    %v316 = vld [vmem:[%s3 + $0x28] sm:$0xff]
    %v317 = vld [vmem:[%s3 + $0x30] sm:$0xff]
    %v318 = vld [vmem:[%s3 + $0x38] sm:$0xff]
    %v319 = vld [vmem:[%s3 + $0x40] sm:$0xff]
    %v320 = vld [vmem:[%s3 + $0x48] sm:$0xff]
    %v321 = vld [vmem:[%s3 + $0x50] sm:$0xff]
    %v322 = vld [vmem:[%s3 + $0x58] sm:$0xff]
    %v323 = vld [vmem:[%s3 + $0x60] sm:$0xff]
    %v324 = vld [vmem:[%s3 + $0x68] sm:$0xff]
    %v325 = vld [vmem:[%s3 + $0x70] sm:$0xff]
    %v326 = vld [vmem:[%s3 + $0x78] sm:$0xff]
    %v327 = vld [vmem:[%s2] sm:$0x1]
    %v329 = vlaneseq
    %v330 = vshrl.u32 %v329, 7
    %v331 = vsub.s32 0, %v330
    %v332 = vrot.slane %v327, %v331
    %v334 = vadd.f32 %v311, %v332
    %v335 = vadd.f32 %v312, %v332
    %v336 = vadd.f32 %v313, %v332
    %v337 = vadd.f32 %v314, %v332
    %v338 = vadd.f32 %v315, %v332
    %v339 = vadd.f32 %v316, %v332
    %v340 = vadd.f32 %v317, %v332
    %v341 = vadd.f32 %v318, %v332
    %v342 = vadd.f32 %v319, %v332
    %v343 = vadd.f32 %v320, %v332
    %v344 = vadd.f32 %v321, %v332
    %v345 = vadd.f32 %v322, %v332
    %v346 = vadd.f32 %v323, %v332
    %v347 = vadd.f32 %v324, %v332
    %v348 = vadd.f32 %v325, %v332
    %v349 = vadd.f32 %v326, %v332
    %350 = vst [vmem:[%s3] sm:$0xff] %v334
    %351 = vst [vmem:[%s3 + $0x8] sm:$0xff] %v335
    %352 = vst [vmem:[%s3 + $0x10] sm:$0xff] %v336
    %353 = vst [vmem:[%s3 + $0x18] sm:$0xff] %v337
    %354 = vst [vmem:[%s3 + $0x20] sm:$0xff] %v338
    %355 = vst [vmem:[%s3 + $0x28] sm:$0xff] %v339
    %356 = vst [vmem:[%s3 + $0x30] sm:$0xff] %v340
    %357 = vst [vmem:[%s3 + $0x38] sm:$0xff] %v341
    %358 = vst [vmem:[%s3 + $0x40] sm:$0xff] %v342
    %359 = vst [vmem:[%s3 + $0x48] sm:$0xff] %v343
    %360 = vst [vmem:[%s3 + $0x50] sm:$0xff] %v344
    %361 = vst [vmem:[%s3 + $0x58] sm:$0xff] %v345
    %362 = vst [vmem:[%s3 + $0x60] sm:$0xff] %v346
    %363 = vst [vmem:[%s3 + $0x68] sm:$0xff] %v347
    %364 = vst [vmem:[%s3 + $0x70] sm:$0xff] %v348
    %365 = vst [vmem:[%s3 + $0x78] sm:$0xff] %v349
  $region21: #{gcn_encoder_forward.3} parent=0 // pred_fallthru
    _
  // Predicated region
  $region22: #{gcn_encoder_forward.3} parent=0 // pred_check
    _
  $region23: #{gcn_encoder_forward.3} parent=0 // pred_check_branch
    %367 = sbr.rel (0) target = $region25
  $region24: #{gcn_encoder_forward.3} parent=0 // pred_region
    _
  $region25: #{gcn_encoder_forward.3} parent=0 // pred_fallthru
    _
  // Predicated region
  $region26: #{gcn_encoder_forward.3} parent=0 // pred_check
    _
  $region27: #{gcn_encoder_forward.3} parent=0 // pred_check_branch
    %369 = sbr.rel (0) target = $region29
  $region28: #{gcn_encoder_forward.3} parent=0 // pred_region
    _
  $region29: #{gcn_encoder_forward.3} parent=0 // pred_fallthru
    _

// kernel: gcn_encoder_forward.2
$region0: #{gcn_encoder_forward.2}
  #allocation0 [shape = 'u32[]', space=smem, size = 0x4, offset = 0x4, fixed_abs, tag = 'smem constant byte address 0x4 - core index']
  #allocation1 [shape = 'u32[144,128]{1,0:T(1,128)}', space=vmem, size = 0x12000, scoped, tag = 'internal scratch']
  #allocation2 [shape = 'f32[128,128]{1,0:T(8,128)}', space=vmem, size = 0x10000, scoped, tag = 'scratch operand']
  %s0 = inlined_call_operand.vmem [shape: bf16[128,128], index: 0, kind: input, shape index: {}]
  %s1 = inlined_call_operand.vmem [shape: bf16[128,128], index: 1, kind: input, shape index: {}]
  %s2 = inlined_call_operand.vmem [shape: bf16[128,128], index: 2, kind: input, shape index: {}]
  %s3 = inlined_call_operand.vmem [shape: f32[1,128], index: 3, kind: input, shape index: {}]
  %s4 = inlined_call_operand.vmem [shape: bf16[128,128], index: 4, kind: input, shape index: {}]
  %s5 = inlined_call_operand.vmem [shape: bf16[128,128], index: 5, kind: output, shape index: {}]
  %s6 = sld [smem:[#allocation0]]
  $region38: #{gcn_encoder_forward.2} parent=0
    _
  %s8 = ssub.s32 1, %s6
  %s9 = scalar_select 0, %s8, %s6
  // Predicated region
  $region2: #{gcn_encoder_forward.2} parent=0 // pred_check
    _
  $region3: #{gcn_encoder_forward.2} parent=0 // pred_check_branch
    %11 = sbr.rel (0) target = $region5
  $region4: #{gcn_encoder_forward.2} parent=0 // pred_region
    _
  $region5: #{gcn_encoder_forward.2} parent=0 // pred_fallthru
    _
  // Predicated region
  $region6: #{gcn_encoder_forward.2} parent=0 // pred_check
    _
  $region7: #{gcn_encoder_forward.2} parent=0 // pred_check_branch
    %13 = sbr.rel (0) target = $region9
  $region8: #{gcn_encoder_forward.2} parent=0 // pred_region
    _
  $region9: #{gcn_encoder_forward.2} parent=0 // pred_fallthru
    _
  // Predicated region
  $region10: #{gcn_encoder_forward.2} parent=0 // pred_check
    _
  $region11: #{gcn_encoder_forward.2} parent=0 // pred_check_branch
    %15 = sbr.rel (0) target = $region13
  $region12: #{gcn_encoder_forward.2} parent=0 // pred_region
    _
  $region13: #{gcn_encoder_forward.2} parent=0 // pred_fallthru
    _
  // Predicated region
  $region14: #{gcn_encoder_forward.2} parent=0 // pred_check
    _
  $region15: #{gcn_encoder_forward.2} parent=0 // pred_check_branch
    %17 = sbr.rel (0) target = $region17
  $region16: #{gcn_encoder_forward.2} parent=0 // pred_region
    _
  $region17: #{gcn_encoder_forward.2} parent=0 // pred_fallthru
    _
  // Predicated region
  $region18: #{gcn_encoder_forward.2} parent=0 // pred_check
    _
  $region19: #{gcn_encoder_forward.2} parent=0 // pred_check_branch
    %19 = sbr.rel (0) target = $region21
  $region20: #{gcn_encoder_forward.2} parent=0 // pred_region
    _
  $region21: #{gcn_encoder_forward.2} parent=0 // pred_fallthru
    _
  %p21 = scmp.eq.s32.totalorder 0, 0
  // Predicated region
  $region22: #{gcn_encoder_forward.2} parent=0 // pred_check
    %p22 = pneg %p21
  $region23: #{gcn_encoder_forward.2} parent=0 // pred_check_branch
    %24 = sbr.rel (%p22) target = $region25
  $region24: #{gcn_encoder_forward.2} parent=0 // pred_region
    %25 = vst [vmem:[#allocation2] sm:$0xff] 0.0
    %26 = vst [vmem:[#allocation2 + $0x8] sm:$0xff] 0.0
    %27 = vst [vmem:[#allocation2 + $0x10] sm:$0xff] 0.0
    %28 = vst [vmem:[#allocation2 + $0x18] sm:$0xff] 0.0
    %29 = vst [vmem:[#allocation2 + $0x20] sm:$0xff] 0.0
    %30 = vst [vmem:[#allocation2 + $0x28] sm:$0xff] 0.0
    %31 = vst [vmem:[#allocation2 + $0x30] sm:$0xff] 0.0
    %32 = vst [vmem:[#allocation2 + $0x38] sm:$0xff] 0.0
    %33 = vst [vmem:[#allocation2 + $0x40] sm:$0xff] 0.0
    %34 = vst [vmem:[#allocation2 + $0x48] sm:$0xff] 0.0
    %35 = vst [vmem:[#allocation2 + $0x50] sm:$0xff] 0.0
    %36 = vst [vmem:[#allocation2 + $0x58] sm:$0xff] 0.0
    %37 = vst [vmem:[#allocation2 + $0x60] sm:$0xff] 0.0
    %38 = vst [vmem:[#allocation2 + $0x68] sm:$0xff] 0.0
    %39 = vst [vmem:[#allocation2 + $0x70] sm:$0xff] 0.0
    %40 = vst [vmem:[#allocation2 + $0x78] sm:$0xff] 0.0
  $region25: #{gcn_encoder_forward.2} parent=0 // pred_fallthru
    _
  %v41 = vld [vmem:[#allocation2] sm:$0xff]
  %v42 = vld [vmem:[#allocation2 + $0x8] sm:$0xff]
  %v43 = vld [vmem:[#allocation2 + $0x10] sm:$0xff]
  %v44 = vld [vmem:[#allocation2 + $0x18] sm:$0xff]
  %v45 = vld [vmem:[#allocation2 + $0x20] sm:$0xff]
  %v46 = vld [vmem:[#allocation2 + $0x28] sm:$0xff]
  %v47 = vld [vmem:[#allocation2 + $0x30] sm:$0xff]
  %v48 = vld [vmem:[#allocation2 + $0x38] sm:$0xff]
  %v49 = vld [vmem:[#allocation2 + $0x40] sm:$0xff]
  %v50 = vld [vmem:[#allocation2 + $0x48] sm:$0xff]
  %v51 = vld [vmem:[#allocation2 + $0x50] sm:$0xff]
  %v52 = vld [vmem:[#allocation2 + $0x58] sm:$0xff]
  %v53 = vld [vmem:[#allocation2 + $0x60] sm:$0xff]
  %v54 = vld [vmem:[#allocation2 + $0x68] sm:$0xff]
  %v55 = vld [vmem:[#allocation2 + $0x70] sm:$0xff]
  %v56 = vld [vmem:[#allocation2 + $0x78] sm:$0xff]
  %v57 = vld [vmem:[%s0] sm:$0xf]
  %v58 = vld [vmem:[%s0 + $0x4] sm:$0xf]
  %v59 = vld [vmem:[%s0 + $0x8] sm:$0xf]
  %v60 = vld [vmem:[%s0 + $0xc] sm:$0xf]
  %v61 = vld [vmem:[%s0 + $0x10] sm:$0xf]
  %v62 = vld [vmem:[%s0 + $0x14] sm:$0xf]
  %v63 = vld [vmem:[%s0 + $0x18] sm:$0xf]
  %v64 = vld [vmem:[%s0 + $0x1c] sm:$0xf]
  %v65 = vld [vmem:[%s0 + $0x20] sm:$0xf]
  %v66 = vld [vmem:[%s0 + $0x24] sm:$0xf]
  %v67 = vld [vmem:[%s0 + $0x28] sm:$0xf]
  %v68 = vld [vmem:[%s0 + $0x2c] sm:$0xf]
  %v69 = vld [vmem:[%s0 + $0x30] sm:$0xf]
  %v70 = vld [vmem:[%s0 + $0x34] sm:$0xf]
  %v71 = vld [vmem:[%s0 + $0x38] sm:$0xf]
  %v72 = vld [vmem:[%s0 + $0x3c] sm:$0xf]
  %v73 = vld [vmem:[%s1] sm:$0xf]
  %v74 = vld [vmem:[%s1 + $0x4] sm:$0xf]
  %v75 = vld [vmem:[%s1 + $0x8] sm:$0xf]
  %v76 = vld [vmem:[%s1 + $0xc] sm:$0xf]
  %v77 = vld [vmem:[%s1 + $0x10] sm:$0xf]
  %v78 = vld [vmem:[%s1 + $0x14] sm:$0xf]
  %v79 = vld [vmem:[%s1 + $0x18] sm:$0xf]
  %v80 = vld [vmem:[%s1 + $0x1c] sm:$0xf]
  %v81 = vld [vmem:[%s1 + $0x20] sm:$0xf]
  %v82 = vld [vmem:[%s1 + $0x24] sm:$0xf]
  %v83 = vld [vmem:[%s1 + $0x28] sm:$0xf]
  %v84 = vld [vmem:[%s1 + $0x2c] sm:$0xf]
  %v85 = vld [vmem:[%s1 + $0x30] sm:$0xf]
  %v86 = vld [vmem:[%s1 + $0x34] sm:$0xf]
  %v87 = vld [vmem:[%s1 + $0x38] sm:$0xf]
  %v88 = vld [vmem:[%s1 + $0x3c] sm:$0xf]
  %v105 = vunpack.c.l.b16 %v57
  %v106 = vunpack.c.l.b16 %v58
  %v107 = vunpack.c.l.b16 %v59
  %v108 = vunpack.c.l.b16 %v60
  %v109 = vunpack.c.l.b16 %v61
  %v110 = vunpack.c.l.b16 %v62
  %v111 = vunpack.c.l.b16 %v63
  %v112 = vunpack.c.l.b16 %v64
  %v113 = vunpack.c.l.b16 %v65
  %v114 = vunpack.c.l.b16 %v66
  %v115 = vunpack.c.l.b16 %v67
  %v116 = vunpack.c.l.b16 %v68
  %v117 = vunpack.c.l.b16 %v69
  %v118 = vunpack.c.l.b16 %v70
  %v119 = vunpack.c.l.b16 %v71
  %v120 = vunpack.c.l.b16 %v72
  %v121 = vpack.c.b16 %v106, %v105
  %v122 = vpack.c.b16 %v108, %v107
  %v123 = vpack.c.b16 %v110, %v109
  %v124 = vpack.c.b16 %v112, %v111
  %v125 = vpack.c.b16 %v114, %v113
  %v126 = vpack.c.b16 %v116, %v115
  %v127 = vpack.c.b16 %v118, %v117
  %v128 = vpack.c.b16 %v120, %v119
  %v153 = vunpack.c.l.b16 %v73
  %v154 = vunpack.c.l.b16 %v74
  %v155 = vunpack.c.l.b16 %v75
  %v156 = vunpack.c.l.b16 %v76
  %v157 = vunpack.c.l.b16 %v77
  %v158 = vunpack.c.l.b16 %v78
  %v159 = vunpack.c.l.b16 %v79
  %v160 = vunpack.c.l.b16 %v80
  %v161 = vunpack.c.l.b16 %v81
  %v162 = vunpack.c.l.b16 %v82
  %v163 = vunpack.c.l.b16 %v83
  %v164 = vunpack.c.l.b16 %v84
  %v165 = vunpack.c.l.b16 %v85
  %v166 = vunpack.c.l.b16 %v86
  %v167 = vunpack.c.l.b16 %v87
  %v168 = vunpack.c.l.b16 %v88
  %v169 = vpack.c.b16 %v154, %v153
  %v170 = vpack.c.b16 %v156, %v155
  %v171 = vpack.c.b16 %v158, %v157
  %v172 = vpack.c.b16 %v160, %v159
  %v173 = vpack.c.b16 %v162, %v161
  %v174 = vpack.c.b16 %v164, %v163
  %v175 = vpack.c.b16 %v166, %v165
  %v176 = vpack.c.b16 %v168, %v167
  %185 = vmatprep.subr.bf16.mxu0 0
  %186 = vmatpush1.bf16.msra.mxu0 %v169
  %187 = vmatprep.subr.bf16.mxu0 0
  %188 = vmatpush1.bf16.msra.mxu0 %v170
  %189 = vmatprep.subr.bf16.mxu0 0
  %190 = vmatpush1.bf16.msra.mxu0 %v171
  %191 = vmatprep.subr.bf16.mxu0 0
  %192 = vmatpush1.bf16.msra.mxu0 %v172
  %193 = vmatprep.subr.bf16.mxu0 0
  %194 = vmatpush1.bf16.msra.mxu0 %v173
  %195 = vmatprep.subr.bf16.mxu0 0
  %196 = vmatpush1.bf16.msra.mxu0 %v174
  %197 = vmatprep.subr.bf16.mxu0 0
  %198 = vmatpush1.bf16.msra.mxu0 %v175
  %199 = vmatprep.subr.bf16.mxu0 0
  %200 = vmatpush1.bf16.msra.mxu0 %v176
  %201 = vmatprep.subr.bf16.mxu0 0
  %202 = vmatpush1.bf16.msra.mxu0 0
  %203 = vmatprep.subr.bf16.mxu0 0
  %204 = vmatpush1.bf16.msra.mxu0 0
  %205 = vmatprep.subr.bf16.mxu0 0
  %206 = vmatpush1.bf16.msra.mxu0 0
  %207 = vmatprep.subr.bf16.mxu0 0
  %208 = vmatpush1.bf16.msra.mxu0 0
  %209 = vmatprep.subr.bf16.mxu0 0
  %210 = vmatpush1.bf16.msra.mxu0 0
  %211 = vmatprep.subr.bf16.mxu0 0
  %212 = vmatpush1.bf16.msra.mxu0 0
  %213 = vmatprep.subr.bf16.mxu0 0
  %214 = vmatpush1.bf16.msra.mxu0 0
  %215 = vmatprep.subr.bf16.mxu0 0
  %216 = vmatpush1.bf16.msra.mxu0 0
  %217 = vmatprep.mubr.bf16.mxu0 0
  %218 = vmatmul.mubr.bf16.gmra.mrb[0].mxu0 %v121
  %v219 = vpop.f32.mrb[0].mxu0
  %v220 = vadd.f32 0.0, %v219
  %v221 = vpop.f32.mrb[0].mxu0
  %v222 = vpop.f32.mrb[0].mxu0
  %v223 = vadd.f32 0.0, %v222
  %v224 = vpop.f32.mrb[0].mxu0
  %225 = vmatprep.mubr.bf16.mxu0 0
  %226 = vmatmul.mubr.bf16.gmra.mrb[0].mxu0 %v122
  %v227 = vpop.f32.mrb[0].mxu0
  %v228 = vadd.f32 0.0, %v227
  %v229 = vpop.f32.mrb[0].mxu0
  %v230 = vpop.f32.mrb[0].mxu0
  %v231 = vadd.f32 0.0, %v230
  %v232 = vpop.f32.mrb[0].mxu0
  %233 = vmatprep.mubr.bf16.mxu0 0
  %234 = vmatmul.mubr.bf16.gmra.mrb[0].mxu0 %v123
  %v235 = vpop.f32.mrb[0].mxu0
  %v236 = vadd.f32 0.0, %v235
  %v237 = vpop.f32.mrb[0].mxu0
  %v238 = vpop.f32.mrb[0].mxu0
  %v239 = vadd.f32 0.0, %v238
  %v240 = vpop.f32.mrb[0].mxu0
  %241 = vmatprep.mubr.bf16.mxu0 0
  %242 = vmatmul.mubr.bf16.gmra.mrb[0].mxu0 %v124
  %v243 = vpop.f32.mrb[0].mxu0
  %v244 = vadd.f32 0.0, %v243
  %v245 = vpop.f32.mrb[0].mxu0
  %v246 = vpop.f32.mrb[0].mxu0
  %v247 = vadd.f32 0.0, %v246
  %v248 = vpop.f32.mrb[0].mxu0
  %249 = vmatprep.mubr.bf16.mxu0 0
  %250 = vmatmul.mubr.bf16.gmra.mrb[0].mxu0 %v125
  %v251 = vpop.f32.mrb[0].mxu0
  %v252 = vadd.f32 0.0, %v251
  %v253 = vpop.f32.mrb[0].mxu0
  %v254 = vpop.f32.mrb[0].mxu0
  %v255 = vadd.f32 0.0, %v254
  %v256 = vpop.f32.mrb[0].mxu0
  %257 = vmatprep.mubr.bf16.mxu0 0
  %258 = vmatmul.mubr.bf16.gmra.mrb[0].mxu0 %v126
  %v259 = vpop.f32.mrb[0].mxu0
  %v260 = vadd.f32 0.0, %v259
  %v261 = vpop.f32.mrb[0].mxu0
  %v262 = vpop.f32.mrb[0].mxu0
  %v263 = vadd.f32 0.0, %v262
  %v264 = vpop.f32.mrb[0].mxu0
  %265 = vmatprep.mubr.bf16.mxu0 0
  %266 = vmatmul.mubr.bf16.gmra.mrb[0].mxu0 %v127
  %v267 = vpop.f32.mrb[0].mxu0
  %v268 = vadd.f32 0.0, %v267
  %v269 = vpop.f32.mrb[0].mxu0
  %v270 = vpop.f32.mrb[0].mxu0
  %v271 = vadd.f32 0.0, %v270
  %v272 = vpop.f32.mrb[0].mxu0
  %273 = vmatprep.mubr.bf16.mxu0 0
  %274 = vmatmul.mubr.bf16.gmra.mrb[0].mxu0 %v128
  %v275 = vpop.f32.mrb[0].mxu0
  %v276 = vadd.f32 0.0, %v275
  %v277 = vpop.f32.mrb[0].mxu0
  %v278 = vpop.f32.mrb[0].mxu0
  %v279 = vadd.f32 0.0, %v278
  %v280 = vpop.f32.mrb[0].mxu0
  %281 = vdwg.mxu0
  %v282 = vadd.f32 %v41, %v220
  %v283 = vadd.f32 %v42, %v223
  %v284 = vadd.f32 %v43, %v228
  %v285 = vadd.f32 %v44, %v231
  %v286 = vadd.f32 %v45, %v236
  %v287 = vadd.f32 %v46, %v239
  %v288 = vadd.f32 %v47, %v244
  %v289 = vadd.f32 %v48, %v247
  %v290 = vadd.f32 %v49, %v252
  %v291 = vadd.f32 %v50, %v255
  %v292 = vadd.f32 %v51, %v260
  %v293 = vadd.f32 %v52, %v263
  %v294 = vadd.f32 %v53, %v268
  %v295 = vadd.f32 %v54, %v271
  %v296 = vadd.f32 %v55, %v276
  %v297 = vadd.f32 %v56, %v279
  %298 = vst [vmem:[#allocation2] sm:$0xff] %v282
  %299 = vst [vmem:[#allocation2 + $0x8] sm:$0xff] %v283
  %300 = vst [vmem:[#allocation2 + $0x10] sm:$0xff] %v284
  %301 = vst [vmem:[#allocation2 + $0x18] sm:$0xff] %v285
  %302 = vst [vmem:[#allocation2 + $0x20] sm:$0xff] %v286
  %303 = vst [vmem:[#allocation2 + $0x28] sm:$0xff] %v287
  %304 = vst [vmem:[#allocation2 + $0x30] sm:$0xff] %v288
  %305 = vst [vmem:[#allocation2 + $0x38] sm:$0xff] %v289
  %306 = vst [vmem:[#allocation2 + $0x40] sm:$0xff] %v290
  %307 = vst [vmem:[#allocation2 + $0x48] sm:$0xff] %v291
  %308 = vst [vmem:[#allocation2 + $0x50] sm:$0xff] %v292
  %309 = vst [vmem:[#allocation2 + $0x58] sm:$0xff] %v293
  %310 = vst [vmem:[#allocation2 + $0x60] sm:$0xff] %v294
  %311 = vst [vmem:[#allocation2 + $0x68] sm:$0xff] %v295
  %312 = vst [vmem:[#allocation2 + $0x70] sm:$0xff] %v296
  %313 = vst [vmem:[#allocation2 + $0x78] sm:$0xff] %v297
  // Predicated region
  $region26: #{gcn_encoder_forward.2} parent=0 // pred_check
    %p314 = pneg %p21
  $region27: #{gcn_encoder_forward.2} parent=0 // pred_check_branch
    %316 = sbr.rel (%p314) target = $region29
  $region28: #{gcn_encoder_forward.2} parent=0 // pred_region
    %v317 = vld [vmem:[#allocation2] sm:$0xff]
    %v318 = vld [vmem:[#allocation2 + $0x8] sm:$0xff]
    %v319 = vld [vmem:[#allocation2 + $0x10] sm:$0xff]
    %v320 = vld [vmem:[#allocation2 + $0x18] sm:$0xff]
    %v321 = vld [vmem:[#allocation2 + $0x20] sm:$0xff]
    %v322 = vld [vmem:[#allocation2 + $0x28] sm:$0xff]
    %v323 = vld [vmem:[#allocation2 + $0x30] sm:$0xff]
    %v324 = vld [vmem:[#allocation2 + $0x38] sm:$0xff]
    %v325 = vld [vmem:[#allocation2 + $0x40] sm:$0xff]
    %v326 = vld [vmem:[#allocation2 + $0x48] sm:$0xff]
    %v327 = vld [vmem:[#allocation2 + $0x50] sm:$0xff]
    %v328 = vld [vmem:[#allocation2 + $0x58] sm:$0xff]
    %v329 = vld [vmem:[#allocation2 + $0x60] sm:$0xff]
    %v330 = vld [vmem:[#allocation2 + $0x68] sm:$0xff]
    %v331 = vld [vmem:[#allocation2 + $0x70] sm:$0xff]
    %v332 = vld [vmem:[#allocation2 + $0x78] sm:$0xff]
    %v333 = vpack.c.bf16 %v318, %v317
    %v334 = vpack.c.bf16 %v320, %v319
    %v335 = vpack.c.bf16 %v322, %v321
    %v336 = vpack.c.bf16 %v324, %v323
    %v337 = vpack.c.bf16 %v326, %v325
    %v338 = vpack.c.bf16 %v328, %v327
    %v339 = vpack.c.bf16 %v330, %v329
    %v340 = vpack.c.bf16 %v332, %v331
    %v341 = vld [vmem:[%s2] sm:$0xf]
    %v342 = vld [vmem:[%s2 + $0x4] sm:$0xf]
    %v343 = vld [vmem:[%s2 + $0x8] sm:$0xf]
    %v344 = vld [vmem:[%s2 + $0xc] sm:$0xf]
    %v345 = vld [vmem:[%s2 + $0x10] sm:$0xf]
    %v346 = vld [vmem:[%s2 + $0x14] sm:$0xf]
    %v347 = vld [vmem:[%s2 + $0x18] sm:$0xf]
    %v348 = vld [vmem:[%s2 + $0x1c] sm:$0xf]
    %v349 = vld [vmem:[%s2 + $0x20] sm:$0xf]
    %v350 = vld [vmem:[%s2 + $0x24] sm:$0xf]
    %v351 = vld [vmem:[%s2 + $0x28] sm:$0xf]
    %v352 = vld [vmem:[%s2 + $0x2c] sm:$0xf]
    %v353 = vld [vmem:[%s2 + $0x30] sm:$0xf]
    %v354 = vld [vmem:[%s2 + $0x34] sm:$0xf]
    %v355 = vld [vmem:[%s2 + $0x38] sm:$0xf]
    %v356 = vld [vmem:[%s2 + $0x3c] sm:$0xf]
    %v357 = vld [vmem:[%s3] sm:$0x1]
    %v359 = vlaneseq
    %v360 = vshrl.u32 %v359, 7
    %v361 = vsub.s32 0, %v360
    %v362 = vrot.slane %v357, %v361
    %v380 = vunpack.c.l.b16 %v341
    %v381 = vunpack.c.l.b16 %v342
    %v382 = vunpack.c.l.b16 %v343
    %v383 = vunpack.c.l.b16 %v344
    %v384 = vunpack.c.l.b16 %v345
    %v385 = vunpack.c.l.b16 %v346
    %v386 = vunpack.c.l.b16 %v347
    %v387 = vunpack.c.l.b16 %v348
    %v388 = vunpack.c.l.b16 %v349
    %v389 = vunpack.c.l.b16 %v350
    %v390 = vunpack.c.l.b16 %v351
    %v391 = vunpack.c.l.b16 %v352
    %v392 = vunpack.c.l.b16 %v353
    %v393 = vunpack.c.l.b16 %v354
    %v394 = vunpack.c.l.b16 %v355
    %v395 = vunpack.c.l.b16 %v356
    %v396 = vpack.c.b16 %v381, %v380
    %v397 = vpack.c.b16 %v383, %v382
    %v398 = vpack.c.b16 %v385, %v384
    %v399 = vpack.c.b16 %v387, %v386
    %v400 = vpack.c.b16 %v389, %v388
    %v401 = vpack.c.b16 %v391, %v390
    %v402 = vpack.c.b16 %v393, %v392
    %v403 = vpack.c.b16 %v395, %v394
    %412 = vmatprep.subr.bf16.mxu0 0
    %413 = vmatpush1.bf16.msra.mxu0 %v396
    %414 = vmatprep.subr.bf16.mxu0 0
    %415 = vmatpush1.bf16.msra.mxu0 %v397
    %416 = vmatprep.subr.bf16.mxu0 0
    %417 = vmatpush1.bf16.msra.mxu0 %v398
    %418 = vmatprep.subr.bf16.mxu0 0
    %419 = vmatpush1.bf16.msra.mxu0 %v399
    %420 = vmatprep.subr.bf16.mxu0 0
    %421 = vmatpush1.bf16.msra.mxu0 %v400
    %422 = vmatprep.subr.bf16.mxu0 0
    %423 = vmatpush1.bf16.msra.mxu0 %v401
    %424 = vmatprep.subr.bf16.mxu0 0
    %425 = vmatpush1.bf16.msra.mxu0 %v402
    %426 = vmatprep.subr.bf16.mxu0 0
    %427 = vmatpush1.bf16.msra.mxu0 %v403
    %428 = vmatprep.subr.bf16.mxu0 0
    %429 = vmatpush1.bf16.msra.mxu0 0
    %430 = vmatprep.subr.bf16.mxu0 0
    %431 = vmatpush1.bf16.msra.mxu0 0
    %432 = vmatprep.subr.bf16.mxu0 0
    %433 = vmatpush1.bf16.msra.mxu0 0
    %434 = vmatprep.subr.bf16.mxu0 0
    %435 = vmatpush1.bf16.msra.mxu0 0
    %436 = vmatprep.subr.bf16.mxu0 0
    %437 = vmatpush1.bf16.msra.mxu0 0
    %438 = vmatprep.subr.bf16.mxu0 0
    %439 = vmatpush1.bf16.msra.mxu0 0
    %440 = vmatprep.subr.bf16.mxu0 0
    %441 = vmatpush1.bf16.msra.mxu0 0
    %442 = vmatprep.subr.bf16.mxu0 0
    %443 = vmatpush1.bf16.msra.mxu0 0
    %444 = vmatprep.mubr.bf16.mxu0 0
    %445 = vmatmul.mubr.bf16.gmra.mrb[0].mxu0 %v333
    %v446 = vpop.f32.mrb[0].mxu0
    %v447 = vadd.f32 %v362, %v446
    %v448 = vpop.f32.mrb[0].mxu0
    %v449 = vpop.f32.mrb[0].mxu0
    %v450 = vadd.f32 %v362, %v449
    %v451 = vpop.f32.mrb[0].mxu0
    %452 = vmatprep.mubr.bf16.mxu0 0
    %453 = vmatmul.mubr.bf16.gmra.mrb[0].mxu0 %v334
    %v454 = vpop.f32.mrb[0].mxu0
    %v455 = vadd.f32 %v362, %v454
    %v456 = vpop.f32.mrb[0].mxu0
    %v457 = vpop.f32.mrb[0].mxu0
    %v458 = vadd.f32 %v362, %v457
    %v459 = vpop.f32.mrb[0].mxu0
    %460 = vmatprep.mubr.bf16.mxu0 0
    %461 = vmatmul.mubr.bf16.gmra.mrb[0].mxu0 %v335
    %v462 = vpop.f32.mrb[0].mxu0
    %v463 = vadd.f32 %v362, %v462
    %v464 = vpop.f32.mrb[0].mxu0
    %v465 = vpop.f32.mrb[0].mxu0
    %v466 = vadd.f32 %v362, %v465
    %v467 = vpop.f32.mrb[0].mxu0
    %468 = vmatprep.mubr.bf16.mxu0 0
    %469 = vmatmul.mubr.bf16.gmra.mrb[0].mxu0 %v336
    %v470 = vpop.f32.mrb[0].mxu0
    %v471 = vadd.f32 %v362, %v470
    %v472 = vpop.f32.mrb[0].mxu0
    %v473 = vpop.f32.mrb[0].mxu0
    %v474 = vadd.f32 %v362, %v473
    %v475 = vpop.f32.mrb[0].mxu0
    %476 = vmatprep.mubr.bf16.mxu0 0
    %477 = vmatmul.mubr.bf16.gmra.mrb[0].mxu0 %v337
    %v478 = vpop.f32.mrb[0].mxu0
    %v479 = vadd.f32 %v362, %v478
    %v480 = vpop.f32.mrb[0].mxu0
    %v481 = vpop.f32.mrb[0].mxu0
    %v482 = vadd.f32 %v362, %v481
    %v483 = vpop.f32.mrb[0].mxu0
    %484 = vmatprep.mubr.bf16.mxu0 0
    %485 = vmatmul.mubr.bf16.gmra.mrb[0].mxu0 %v338
    %v486 = vpop.f32.mrb[0].mxu0
    %v487 = vadd.f32 %v362, %v486
    %v488 = vpop.f32.mrb[0].mxu0
    %v489 = vpop.f32.mrb[0].mxu0
    %v490 = vadd.f32 %v362, %v489
    %v491 = vpop.f32.mrb[0].mxu0
    %492 = vmatprep.mubr.bf16.mxu0 0
    %493 = vmatmul.mubr.bf16.gmra.mrb[0].mxu0 %v339
    %v494 = vpop.f32.mrb[0].mxu0
    %v495 = vadd.f32 %v362, %v494
    %v496 = vpop.f32.mrb[0].mxu0
    %v497 = vpop.f32.mrb[0].mxu0
    %v498 = vadd.f32 %v362, %v497
    %v499 = vpop.f32.mrb[0].mxu0
    %500 = vmatprep.mubr.bf16.mxu0 0
    %501 = vmatmul.mubr.bf16.gmra.mrb[0].mxu0 %v340
    %v502 = vpop.f32.mrb[0].mxu0
    %v503 = vadd.f32 %v362, %v502
    %v504 = vpop.f32.mrb[0].mxu0
    %v505 = vpop.f32.mrb[0].mxu0
    %v506 = vadd.f32 %v362, %v505
    %v507 = vpop.f32.mrb[0].mxu0
    %508 = vdwg.mxu0
    %v509 = vmax.f32 %v447, 0.0
    %v510 = vmax.f32 %v450, 0.0
    %v511 = vmax.f32 %v455, 0.0
    %v512 = vmax.f32 %v458, 0.0
    %v513 = vmax.f32 %v463, 0.0
    %v514 = vmax.f32 %v466, 0.0
    %v515 = vmax.f32 %v471, 0.0
    %v516 = vmax.f32 %v474, 0.0
    %v517 = vmax.f32 %v479, 0.0
    %v518 = vmax.f32 %v482, 0.0
    %v519 = vmax.f32 %v487, 0.0
    %v520 = vmax.f32 %v490, 0.0
    %v521 = vmax.f32 %v495, 0.0
    %v522 = vmax.f32 %v498, 0.0
    %v523 = vmax.f32 %v503, 0.0
    %v524 = vmax.f32 %v506, 0.0
    %v525 = vpack.c.bf16 %v510, %v509
    %v526 = vpack.c.bf16 %v512, %v511
    %v527 = vpack.c.bf16 %v514, %v513
    %v528 = vpack.c.bf16 %v516, %v515
    %v529 = vpack.c.bf16 %v518, %v517
    %v530 = vpack.c.bf16 %v520, %v519
    %v531 = vpack.c.bf16 %v522, %v521
    %v532 = vpack.c.bf16 %v524, %v523
    %v533 = vld [vmem:[%s4] sm:$0xf]
    %v534 = vld [vmem:[%s4 + $0x4] sm:$0xf]
    %v535 = vld [vmem:[%s4 + $0x8] sm:$0xf]
    %v536 = vld [vmem:[%s4 + $0xc] sm:$0xf]
    %v537 = vld [vmem:[%s4 + $0x10] sm:$0xf]
    %v538 = vld [vmem:[%s4 + $0x14] sm:$0xf]
    %v539 = vld [vmem:[%s4 + $0x18] sm:$0xf]
    %v540 = vld [vmem:[%s4 + $0x1c] sm:$0xf]
    %v541 = vld [vmem:[%s4 + $0x20] sm:$0xf]
    %v542 = vld [vmem:[%s4 + $0x24] sm:$0xf]
    %v543 = vld [vmem:[%s4 + $0x28] sm:$0xf]
    %v544 = vld [vmem:[%s4 + $0x2c] sm:$0xf]
    %v545 = vld [vmem:[%s4 + $0x30] sm:$0xf]
    %v546 = vld [vmem:[%s4 + $0x34] sm:$0xf]
    %v547 = vld [vmem:[%s4 + $0x38] sm:$0xf]
    %v548 = vld [vmem:[%s4 + $0x3c] sm:$0xf]
    %v565 = vunpack.c.l.b16 %v533
    %v566 = vunpack.c.l.b16 %v534
    %v567 = vunpack.c.l.b16 %v535
    %v568 = vunpack.c.l.b16 %v536
    %v569 = vunpack.c.l.b16 %v537
    %v570 = vunpack.c.l.b16 %v538
    %v571 = vunpack.c.l.b16 %v539
    %v572 = vunpack.c.l.b16 %v540
    %v573 = vunpack.c.l.b16 %v541
    %v574 = vunpack.c.l.b16 %v542
    %v575 = vunpack.c.l.b16 %v543
    %v576 = vunpack.c.l.b16 %v544
    %v577 = vunpack.c.l.b16 %v545
    %v578 = vunpack.c.l.b16 %v546
    %v579 = vunpack.c.l.b16 %v547
    %v580 = vunpack.c.l.b16 %v548
    %v581 = vpack.c.b16 %v566, %v565
    %v582 = vpack.c.b16 %v568, %v567
    %v583 = vpack.c.b16 %v570, %v569
    %v584 = vpack.c.b16 %v572, %v571
    %v585 = vpack.c.b16 %v574, %v573
    %v586 = vpack.c.b16 %v576, %v575
    %v587 = vpack.c.b16 %v578, %v577
    %v588 = vpack.c.b16 %v580, %v579
    %597 = vmatprep.subr.bf16.mxu0 0
    %598 = vmatpush1.bf16.msra.mxu0 %v581
    %599 = vmatprep.subr.bf16.mxu0 0
    %600 = vmatpush1.bf16.msra.mxu0 %v582
    %601 = vmatprep.subr.bf16.mxu0 0
    %602 = vmatpush1.bf16.msra.mxu0 %v583
    %603 = vmatprep.subr.bf16.mxu0 0
    %604 = vmatpush1.bf16.msra.mxu0 %v584
    %605 = vmatprep.subr.bf16.mxu0 0
    %606 = vmatpush1.bf16.msra.mxu0 %v585
    %607 = vmatprep.subr.bf16.mxu0 0
    %608 = vmatpush1.bf16.msra.mxu0 %v586
    %609 = vmatprep.subr.bf16.mxu0 0
    %610 = vmatpush1.bf16.msra.mxu0 %v587
    %611 = vmatprep.subr.bf16.mxu0 0
    %612 = vmatpush1.bf16.msra.mxu0 %v588
    %613 = vmatprep.subr.bf16.mxu0 0
    %614 = vmatpush1.bf16.msra.mxu0 0
    %615 = vmatprep.subr.bf16.mxu0 0
    %616 = vmatpush1.bf16.msra.mxu0 0
    %617 = vmatprep.subr.bf16.mxu0 0
    %618 = vmatpush1.bf16.msra.mxu0 0
    %619 = vmatprep.subr.bf16.mxu0 0
    %620 = vmatpush1.bf16.msra.mxu0 0
    %621 = vmatprep.subr.bf16.mxu0 0
    %622 = vmatpush1.bf16.msra.mxu0 0
    %623 = vmatprep.subr.bf16.mxu0 0
    %624 = vmatpush1.bf16.msra.mxu0 0
    %625 = vmatprep.subr.bf16.mxu0 0
    %626 = vmatpush1.bf16.msra.mxu0 0
    %627 = vmatprep.subr.bf16.mxu0 0
    %628 = vmatpush1.bf16.msra.mxu0 0
    %629 = vmatprep.mubr.bf16.mxu0 0
    %630 = vmatmul.mubr.bf16.gmra.mrb[0].mxu0 %v525
    %v631 = vpop.f32.mrb[0].mxu0
    %v632 = vadd.f32 0.0, %v631
    %v633 = vpop.f32.mrb[0].mxu0
    %v634 = vpop.f32.mrb[0].mxu0
    %v635 = vadd.f32 0.0, %v634
    %v636 = vpop.f32.mrb[0].mxu0
    %637 = vmatprep.mubr.bf16.mxu0 0
    %638 = vmatmul.mubr.bf16.gmra.mrb[0].mxu0 %v526
    %v639 = vpop.f32.mrb[0].mxu0
    %v640 = vadd.f32 0.0, %v639
    %v641 = vpop.f32.mrb[0].mxu0
    %v642 = vpop.f32.mrb[0].mxu0
    %v643 = vadd.f32 0.0, %v642
    %v644 = vpop.f32.mrb[0].mxu0
    %645 = vmatprep.mubr.bf16.mxu0 0
    %646 = vmatmul.mubr.bf16.gmra.mrb[0].mxu0 %v527
    %v647 = vpop.f32.mrb[0].mxu0
    %v648 = vadd.f32 0.0, %v647
    %v649 = vpop.f32.mrb[0].mxu0
    %v650 = vpop.f32.mrb[0].mxu0
    %v651 = vadd.f32 0.0, %v650
    %v652 = vpop.f32.mrb[0].mxu0
    %653 = vmatprep.mubr.bf16.mxu0 0
    %654 = vmatmul.mubr.bf16.gmra.mrb[0].mxu0 %v528
    %v655 = vpop.f32.mrb[0].mxu0
    %v656 = vadd.f32 0.0, %v655
    %v657 = vpop.f32.mrb[0].mxu0
    %v658 = vpop.f32.mrb[0].mxu0
    %v659 = vadd.f32 0.0, %v658
    %v660 = vpop.f32.mrb[0].mxu0
    %661 = vmatprep.mubr.bf16.mxu0 0
    %662 = vmatmul.mubr.bf16.gmra.mrb[0].mxu0 %v529
    %v663 = vpop.f32.mrb[0].mxu0
    %v664 = vadd.f32 0.0, %v663
    %v665 = vpop.f32.mrb[0].mxu0
    %v666 = vpop.f32.mrb[0].mxu0
    %v667 = vadd.f32 0.0, %v666
    %v668 = vpop.f32.mrb[0].mxu0
    %669 = vmatprep.mubr.bf16.mxu0 0
    %670 = vmatmul.mubr.bf16.gmra.mrb[0].mxu0 %v530
    %v671 = vpop.f32.mrb[0].mxu0
    %v672 = vadd.f32 0.0, %v671
    %v673 = vpop.f32.mrb[0].mxu0
    %v674 = vpop.f32.mrb[0].mxu0
    %v675 = vadd.f32 0.0, %v674
    %v676 = vpop.f32.mrb[0].mxu0
    %677 = vmatprep.mubr.bf16.mxu0 0
    %678 = vmatmul.mubr.bf16.gmra.mrb[0].mxu0 %v531
    %v679 = vpop.f32.mrb[0].mxu0
    %v680 = vadd.f32 0.0, %v679
    %v681 = vpop.f32.mrb[0].mxu0
    %v682 = vpop.f32.mrb[0].mxu0
    %v683 = vadd.f32 0.0, %v682
    %v684 = vpop.f32.mrb[0].mxu0
    %685 = vmatprep.mubr.bf16.mxu0 0
    %686 = vmatmul.mubr.bf16.gmra.mrb[0].mxu0 %v532
    %v687 = vpop.f32.mrb[0].mxu0
    %v688 = vadd.f32 0.0, %v687
    %v689 = vpop.f32.mrb[0].mxu0
    %v690 = vpop.f32.mrb[0].mxu0
    %v691 = vadd.f32 0.0, %v690
    %v692 = vpop.f32.mrb[0].mxu0
    %693 = vdwg.mxu0
    %v694 = vpack.c.bf16 %v635, %v632
    %v695 = vpack.c.bf16 %v643, %v640
    %v696 = vpack.c.bf16 %v651, %v648
    %v697 = vpack.c.bf16 %v659, %v656
    %v698 = vpack.c.bf16 %v667, %v664
    %v699 = vpack.c.bf16 %v675, %v672
    %v700 = vpack.c.bf16 %v683, %v680
    %v701 = vpack.c.bf16 %v691, %v688
    %v710 = vunpack.c.l.b16 %v694
    %v711 = vunpack.c.h.b16 %v694
    %v712 = vunpack.c.l.b16 %v695
    %v713 = vunpack.c.h.b16 %v695
    %v714 = vunpack.c.l.b16 %v696
    %v715 = vunpack.c.h.b16 %v696
    %v716 = vunpack.c.l.b16 %v697
    %v717 = vunpack.c.h.b16 %v697
    %v718 = vunpack.c.l.b16 %v698
    %v719 = vunpack.c.h.b16 %v698
    %v720 = vunpack.c.l.b16 %v699
    %v721 = vunpack.c.h.b16 %v699
    %v722 = vunpack.c.l.b16 %v700
    %v723 = vunpack.c.h.b16 %v700
    %v724 = vunpack.c.l.b16 %v701
    %v725 = vunpack.c.h.b16 %v701
    %v726 = vpack.c.b16 %v710, %v710
    %v727 = vpack.c.b16 %v711, %v711
    %v728 = vpack.c.b16 %v712, %v712
    %v729 = vpack.c.b16 %v713, %v713
    %v730 = vpack.c.b16 %v714, %v714
    %v731 = vpack.c.b16 %v715, %v715
    %v732 = vpack.c.b16 %v716, %v716
    %v733 = vpack.c.b16 %v717, %v717
    %v734 = vpack.c.b16 %v718, %v718
    %v735 = vpack.c.b16 %v719, %v719
    %v736 = vpack.c.b16 %v720, %v720
    %v737 = vpack.c.b16 %v721, %v721
    %v738 = vpack.c.b16 %v722, %v722
    %v739 = vpack.c.b16 %v723, %v723
    %v740 = vpack.c.b16 %v724, %v724
    %v741 = vpack.c.b16 %v725, %v725
    %758 = vst [vmem:[%s5] sm:$0xf] %v726
    %759 = vst [vmem:[%s5 + $0x4] sm:$0xf] %v727
    %760 = vst [vmem:[%s5 + $0x8] sm:$0xf] %v728
    %761 = vst [vmem:[%s5 + $0xc] sm:$0xf] %v729
    %762 = vst [vmem:[%s5 + $0x10] sm:$0xf] %v730
    %763 = vst [vmem:[%s5 + $0x14] sm:$0xf] %v731
    %764 = vst [vmem:[%s5 + $0x18] sm:$0xf] %v732
    %765 = vst [vmem:[%s5 + $0x1c] sm:$0xf] %v733
    %766 = vst [vmem:[%s5 + $0x20] sm:$0xf] %v734
    %767 = vst [vmem:[%s5 + $0x24] sm:$0xf] %v735
    %768 = vst [vmem:[%s5 + $0x28] sm:$0xf] %v736
    %769 = vst [vmem:[%s5 + $0x2c] sm:$0xf] %v737
    %770 = vst [vmem:[%s5 + $0x30] sm:$0xf] %v738
    %771 = vst [vmem:[%s5 + $0x34] sm:$0xf] %v739
    %772 = vst [vmem:[%s5 + $0x38] sm:$0xf] %v740
    %773 = vst [vmem:[%s5 + $0x3c] sm:$0xf] %v741
  $region29: #{gcn_encoder_forward.2} parent=0 // pred_fallthru
    _
  // Predicated region
  $region30: #{gcn_encoder_forward.2} parent=0 // pred_check
    _
  $region31: #{gcn_encoder_forward.2} parent=0 // pred_check_branch
    %775 = sbr.rel (0) target = $region33
  $region32: #{gcn_encoder_forward.2} parent=0 // pred_region
    _
  $region33: #{gcn_encoder_forward.2} parent=0 // pred_fallthru
    _
  // Predicated region
  $region34: #{gcn_encoder_forward.2} parent=0 // pred_check
    _
  $region35: #{gcn_encoder_forward.2} parent=0 // pred_check_branch
    %777 = sbr.rel (0) target = $region37
  $region36: #{gcn_encoder_forward.2} parent=0 // pred_region
    _
  $region37: #{gcn_encoder_forward.2} parent=0 // pred_fallthru
    _

</llo_original>
